<compile_context>
chip_gen: v7x
topology: tpu7x:2x2x1
jax: 0.10.0
libtpu: 0.0.40
codegen_flags: <defaults>
</compile_context>

<pallas_src>
import math

import jax
import jax.numpy as jnp
from jax.experimental import pallas as pl
from jax.experimental.pallas import tpu as pltpu

# ----------------------------- model hyper-parameters -----------------------------
B = 2          # batch (= number of windows gridded over)
L = 16         # seq_len
DIN = 4        # enc_in (input_dim)
DM = 32        # d_model
DFF = 64       # d_ff
NL = 2         # e_layers
COUT = 4       # c_out
EPS = 1e-5     # LayerNorm eps (PyTorch default)
BL = B * L     # flattened row count

# ------------------------- packed-parameter buffer layouts ------------------------
# P32: width DM (=32) buffer.  All row offsets are multiples of 8 (sublane aligned).
W_IN_OFF = 0                       # (DIN, DM)       rows reserved: 8
POSB_OFF = 8                       # (L, DM)         fused (input bias + positional enc)
WOUT_OFF = POSB_OFF + L            # (DM, DM)        w_out zero-padded COUT -> DM cols
BOUT_OFF = WOUT_OFF + DM           # (1, DM)         b_out zero-padded, rows reserved: 8
LAYER32_OFF = BOUT_OFF + 8
LN1G_SUB = 0                       # (1, DM)
LN1B_SUB = 8                       # (1, DM)
W2_SUB = 16                        # (DFF, DM)
B2_SUB = W2_SUB + DFF              # (1, DM)
LN2G_SUB = B2_SUB + 8              # (1, DM)
LN2B_SUB = LN2G_SUB + 8            # (1, DM)
LAYER32_STRIDE = LN2B_SUB + 8
R32 = LAYER32_OFF + NL * LAYER32_STRIDE

# P64: width DFF (=64) buffer.
W1_SUB = 0                         # (DM, DFF)
B1_SUB = DM                        # (1, DFF)        rows reserved: 8
LAYER64_STRIDE = B1_SUB + 8
R64 = NL * LAYER64_STRIDE


def _gelu_tanh(x):
    # tanh-approx GELU (EUP-friendly inside the kernel)
    c = math.sqrt(2.0 / math.pi)
    return 0.5 * x * (1.0 + jnp.tanh(c * (x + 0.044715 * x * x * x)))


def _layernorm(x, g, b):
    mu = jnp.mean(x, axis=-1, keepdims=True)
    d = x - mu
    var = jnp.mean(d * d, axis=-1, keepdims=True)
    return d * jax.lax.rsqrt(var + EPS) * g + b


# ------------------------------------ kernel --------------------------------------
def fourier_transformer_kernel(x_ref, dft_ref, p32_ref, p64_ref, o_ref):
    # one window (one batch element) per grid step
    x = x_ref[...]                                                  # (L, DIN)

    # input projection + fused (bias + learnable positional encoding)
    h = jnp.dot(x, p32_ref[W_IN_OFF:W_IN_OFF + DIN, :],
                preferred_element_type=jnp.float32)
    h = h + p32_ref[POSB_OFF:POSB_OFF + L, :]                       # (L, DM)

    dft = dft_ref[...]                                              # (L, L) Re(DFT_L)

    # encoder layers (static unroll over NL)
    for l in range(NL):
        o32 = LAYER32_OFF + l * LAYER32_STRIDE
        o64 = l * LAYER64_STRIDE

        # Fourier mixing along the sequence dim: Cos_L @ h
        mix = jnp.dot(dft, h, preferred_element_type=jnp.float32)
        h = _layernorm(h + mix,
                       p32_ref[o32 + LN1G_SUB:o32 + LN1G_SUB + 1, :],
                       p32_ref[o32 + LN1B_SUB:o32 + LN1B_SUB + 1, :])

        # feed-forward
        ff = jnp.dot(h, p64_ref[o64 + W1_SUB:o64 + W1_SUB + DM, :],
                     preferred_element_type=jnp.float32)
        ff = ff + p64_ref[o64 + B1_SUB:o64 + B1_SUB + 1, :]
        ff = _gelu_tanh(ff)
        ff = jnp.dot(ff, p32_ref[o32 + W2_SUB:o32 + W2_SUB + DFF, :],
                     preferred_element_type=jnp.float32)
        ff = ff + p32_ref[o32 + B2_SUB:o32 + B2_SUB + 1, :]
        h = _layernorm(h + ff,
                       p32_ref[o32 + LN2G_SUB:o32 + LN2G_SUB + 1, :],
                       p32_ref[o32 + LN2B_SUB:o32 + LN2B_SUB + 1, :])

    # output projection (anomaly_detection head); w_out is zero-padded to DM cols so the
    # store stays lane-dense -- the COUT slice happens in the JAX wrapper.
    out = jnp.dot(h, p32_ref[WOUT_OFF:WOUT_OFF + DM, :],
                  preferred_element_type=jnp.float32)
    o_ref[...] = out + p32_ref[BOUT_OFF:BOUT_OFF + 1, :]            # (L, DM) store


def _cost_estimate():
    flops_per_window = 2 * (L * DIN * DM
                            + NL * (L * L * DM + 2 * L * DM * DFF)
                            + L * DM * DM)
    transcendentals_per_window = NL * (L * DFF + 2 * L)             # gelu tanh + LN rsqrt
    bytes_accessed = 4 * (BL * DIN + L * L + R32 * DM + R64 * DFF + BL * DM)
    return pl.CostEstimate(flops=B * flops_per_window,
                           transcendentals=B * transcendentals_per_window,
                           bytes_accessed=bytes_accessed)


@jax.jit
def fourier_transformer_forward(x, dft, p32, p64):
    x2d = x.reshape(BL, DIN)
    out2d = pl.pallas_call(
        fourier_transformer_kernel,
        out_shape=jax.ShapeDtypeStruct((BL, DM), jnp.float32),
        grid=(B,),
        in_specs=[
            pl.BlockSpec((L, DIN), lambda b: (b, 0)),        # per-window activations
            pl.BlockSpec((L, L), lambda b: (0, 0)),          # Re(DFT), VMEM-resident
            pl.BlockSpec((R32, DM), lambda b: (0, 0)),       # packed params, VMEM-resident
            pl.BlockSpec((R64, DFF), lambda b: (0, 0)),      # packed params, VMEM-resident
        ],
        out_specs=pl.BlockSpec((L, DM), lambda b: (b, 0)),
        compiler_params=pltpu.CompilerParams(
            dimension_semantics=("parallel",)),
        cost_estimate=_cost_estimate(),
    )(x2d, dft, p32, p64)
    # lane-dense kernel output; slice the meaningful COUT columns outside the kernel
    return out2d[:, :COUT].reshape(B, L, COUT)


# ------------------------------ param construction --------------------------------
def _xavier(key, shape):
    fan_in, fan_out = shape[-2], shape[-1]
    bound = math.sqrt(6.0 / (fan_in + fan_out))
    return jax.random.uniform(key, shape, jnp.float32, -bound, bound)


def make_params(key):
    ks = jax.random.split(key, 16)
    w_in = _xavier(ks[0], (DIN, DM))
    b_in = jnp.zeros((1, DM), jnp.float32)
    pos = 0.02 * jax.random.normal(ks[1], (L, DM), jnp.float32)

    n = jnp.arange(L, dtype=jnp.float32)
    dftc = jnp.cos(2.0 * jnp.pi * n[:, None] * n[None, :] / L)       # Re(DFT_L)

    ln1g = jnp.ones((NL, 1, DM), jnp.float32)
    ln1b = jnp.zeros((NL, 1, DM), jnp.float32)
    ln2g = jnp.ones((NL, 1, DM), jnp.float32)
    ln2b = jnp.zeros((NL, 1, DM), jnp.float32)
    w1 = _xavier(ks[2], (NL, DM, DFF))
    b1 = jnp.zeros((NL, 1, DFF), jnp.float32)
    w2 = _xavier(ks[3], (NL, DFF, DM))
    b2 = jnp.zeros((NL, 1, DM), jnp.float32)

    w_out = _xavier(ks[4], (DM, COUT))
    b_out = jnp.zeros((1, COUT), jnp.float32)
    return (w_in, b_in, pos, dftc, ln1g, ln1b, w1, b1, w2, b2, ln2g, ln2b, w_out, b_out)


def pack_params(params):
    """Pack the 14 parameter tensors into two width-matched f32 buffers plus the
    per-window (L, L) cosine-DFT matrix (3 constant kernel operands)."""
    (w_in, b_in, pos, dftc, ln1g, ln1b, w1, b1, w2, b2, ln2g, ln2b, w_out, b_out) = params

    posb = pos + b_in                                                # (L, DM) fused add
    w_out_p = jnp.zeros((DM, DM), jnp.float32).at[:, :COUT].set(w_out)
    b_out_p = jnp.zeros((1, DM), jnp.float32).at[:, :COUT].set(b_out)

    p32 = jnp.zeros((R32, DM), jnp.float32)
    p32 = p32.at[W_IN_OFF:W_IN_OFF + DIN].set(w_in)
    p32 = p32.at[POSB_OFF:POSB_OFF + L].set(posb)
    p32 = p32.at[WOUT_OFF:WOUT_OFF + DM].set(w_out_p)
    p32 = p32.at[BOUT_OFF:BOUT_OFF + 1].set(b_out_p)

    p64 = jnp.zeros((R64, DFF), jnp.float32)

    for l in range(NL):
        o32 = LAYER32_OFF + l * LAYER32_STRIDE
        p32 = p32.at[o32 + LN1G_SUB].set(ln1g[l, 0])
        p32 = p32.at[o32 + LN1B_SUB].set(ln1b[l, 0])
        p32 = p32.at[o32 + W2_SUB:o32 + W2_SUB + DFF].set(w2[l])
        p32 = p32.at[o32 + B2_SUB].set(b2[l, 0])
        p32 = p32.at[o32 + LN2G_SUB].set(ln2g[l, 0])
        p32 = p32.at[o32 + LN2B_SUB].set(ln2b[l, 0])

        o64 = l * LAYER64_STRIDE
        p64 = p64.at[o64 + W1_SUB:o64 + W1_SUB + DM].set(w1[l])
        p64 = p64.at[o64 + B1_SUB].set(b1[l, 0])

    return dftc, p32, p64


# ------------------------------- pure-JAX reference --------------------------------
def reference_forward(x, params):
    (w_in, b_in, pos, dftc, ln1g, ln1b, w1, b1, w2, b2, ln2g, ln2b, w_out, b_out) = params
    h = x @ w_in + b_in + pos[None]
    for l in range(NL):
        mix = jnp.einsum("kn,bnd->bkd", dftc, h)
        h = _layernorm(h + mix, ln1g[l], ln1b[l])
        ff = _gelu_tanh(h @ w1[l] + b1[l]) @ w2[l] + b2[l]
        h = _layernorm(h + ff, ln2g[l], ln2b[l])
    return h @ w_out + b_out


# ------------------------------------- main ----------------------------------------
if __name__ == "__main__":
    key = jax.random.PRNGKey(0)
    kx, kp = jax.random.split(key)
    x = jax.random.normal(kx, (B, L, DIN), jnp.float32)
    params = make_params(kp)
    dft, p32, p64 = pack_params(params)

    out = fourier_transformer_forward(x, dft, p32, p64)
    out = jax.block_until_ready(out)

    ref = reference_forward(x, params)
    assert out.shape == (B, L, COUT)
    assert jnp.allclose(out, ref, atol=1e-4, rtol=1e-4), "mismatch vs pure-JAX reference"

    print("KERNEL_OK")
</pallas_src>

<mosaic_0001>
module attributes {stable_mosaic.version = 11 : i64} {
  func.func @fourier_transformer_kernel(%arg0: i32, %arg1: memref<16x4xf32, #tpu.memory_space<vmem>>, %arg2: memref<16x16xf32, #tpu.memory_space<vmem>>, %arg3: memref<272x32xf32, #tpu.memory_space<vmem>>, %arg4: memref<80x64xf32, #tpu.memory_space<vmem>>, %arg5: memref<16x32xf32, #tpu.memory_space<vmem>>) attributes {dimension_semantics = [#tpu.dimension_semantics<parallel>], iteration_bounds = array<i64: 2>, scalar_prefetch = 0 : i64, scratch_operands = 0 : i64, tpu.core_type = #tpu.core_type<tc>, window_params = [{transform_indices = @transform_0, window_bounds = array<i64: 16, 4>}, {pipeline_mode = #tpu.pipeline_mode<synchronous>, transform_indices = @transform_1, window_bounds = array<i64: 16, 16>}, {pipeline_mode = #tpu.pipeline_mode<synchronous>, transform_indices = @transform_2, window_bounds = array<i64: 272, 32>}, {pipeline_mode = #tpu.pipeline_mode<synchronous>, transform_indices = @transform_3, window_bounds = array<i64: 80, 64>}, {transform_indices = @transform_4, window_bounds = array<i64: 16, 32>}]} {
    %c0 = arith.constant 0 : index
    %c0_0 = arith.constant 0 : index
    %0 = vector.load %arg1[%c0, %c0_0] : memref<16x4xf32, #tpu.memory_space<vmem>>, vector<16x4xf32>
    %c0_1 = arith.constant 0 : index
    %c0_2 = arith.constant 0 : index
    %1 = vector.load %arg3[%c0_1, %c0_2] : memref<272x32xf32, #tpu.memory_space<vmem>>, vector<4x32xf32>
    %cst = arith.constant dense<0.000000e+00> : vector<16x32xf32>
    %2 = tpu.matmul %0, %1, %cst {dimension_numbers = #tpu.dot_dimension_numbers<[1], [0], [0], [1], [0, 0, 1, 1], [], []>} : vector<16x4xf32>, vector<4x32xf32>, vector<16x32xf32> -> vector<16x32xf32>
    %c8 = arith.constant 8 : index
    %c0_3 = arith.constant 0 : index
    %3 = vector.load %arg3[%c8, %c0_3] : memref<272x32xf32, #tpu.memory_space<vmem>>, vector<16x32xf32>
    %4 = arith.addf %2, %3 : vector<16x32xf32>
    %c0_4 = arith.constant 0 : index
    %c0_5 = arith.constant 0 : index
    %5 = vector.load %arg2[%c0_4, %c0_5] : memref<16x16xf32, #tpu.memory_space<vmem>>, vector<16x16xf32>
    %cst_6 = arith.constant dense<0.000000e+00> : vector<16x32xf32>
    %6 = tpu.matmul %5, %4, %cst_6 {dimension_numbers = #tpu.dot_dimension_numbers<[1], [0], [0], [1], [0, 0, 1, 1], [], []>} : vector<16x16xf32>, vector<16x32xf32>, vector<16x32xf32> -> vector<16x32xf32>
    %7 = arith.addf %4, %6 : vector<16x32xf32>
    %c64 = arith.constant 64 : index
    %c0_7 = arith.constant 0 : index
    %8 = vector.load %arg3[%c64, %c0_7] : memref<272x32xf32, #tpu.memory_space<vmem>>, vector<1x32xf32>
    %c72 = arith.constant 72 : index
    %c0_8 = arith.constant 0 : index
    %9 = vector.load %arg3[%c72, %c0_8] : memref<272x32xf32, #tpu.memory_space<vmem>>, vector<1x32xf32>
    %cst_9 = arith.constant dense<0.000000e+00> : vector<16xf32>
    %10 = vector.multi_reduction <add>, %7, %cst_9 [1] : vector<16x32xf32> to vector<16xf32>
    %11 = vector.shape_cast %10 : vector<16xf32> to vector<16x1xf32>
    %cst_10 = arith.constant 3.200000e+01 : f32
    %12 = vector.broadcast %cst_10 : f32 to vector<16x1xf32>
    %13 = arith.divf %11, %12 : vector<16x1xf32>
    %14 = vector.broadcast %13 : vector<16x1xf32> to vector<16x32xf32>
    %15 = arith.subf %7, %14 : vector<16x32xf32>
    %16 = arith.mulf %15, %15 : vector<16x32xf32>
    %cst_11 = arith.constant dense<0.000000e+00> : vector<16xf32>
    %17 = vector.multi_reduction <add>, %16, %cst_11 [1] : vector<16x32xf32> to vector<16xf32>
    %18 = vector.shape_cast %17 : vector<16xf32> to vector<16x1xf32>
    %cst_12 = arith.constant 3.200000e+01 : f32
    %19 = vector.broadcast %cst_12 : f32 to vector<16x1xf32>
    %20 = arith.divf %18, %19 : vector<16x1xf32>
    %cst_13 = arith.constant 9.99999974E-6 : f32
    %21 = vector.broadcast %cst_13 : f32 to vector<16x1xf32>
    %22 = arith.addf %20, %21 : vector<16x1xf32>
    %23 = math.rsqrt %22 : vector<16x1xf32>
    %24 = vector.broadcast %23 : vector<16x1xf32> to vector<16x32xf32>
    %25 = arith.mulf %15, %24 : vector<16x32xf32>
    %26 = vector.broadcast %8 : vector<1x32xf32> to vector<16x32xf32>
    %27 = arith.mulf %25, %26 : vector<16x32xf32>
    %28 = vector.broadcast %9 : vector<1x32xf32> to vector<16x32xf32>
    %29 = arith.addf %27, %28 : vector<16x32xf32>
    %c0_14 = arith.constant 0 : index
    %c0_15 = arith.constant 0 : index
    %30 = vector.load %arg4[%c0_14, %c0_15] : memref<80x64xf32, #tpu.memory_space<vmem>>, vector<32x64xf32>
    %cst_16 = arith.constant dense<0.000000e+00> : vector<16x64xf32>
    %31 = tpu.matmul %29, %30, %cst_16 {dimension_numbers = #tpu.dot_dimension_numbers<[1], [0], [0], [1], [0, 0, 1, 1], [], []>} : vector<16x32xf32>, vector<32x64xf32>, vector<16x64xf32> -> vector<16x64xf32>
    %c32 = arith.constant 32 : index
    %c0_17 = arith.constant 0 : index
    %32 = vector.load %arg4[%c32, %c0_17] : memref<80x64xf32, #tpu.memory_space<vmem>>, vector<1x64xf32>
    %33 = vector.broadcast %32 : vector<1x64xf32> to vector<16x64xf32>
    %34 = arith.addf %31, %33 : vector<16x64xf32>
    %cst_18 = arith.constant 5.000000e-01 : f32
    %35 = vector.broadcast %cst_18 : f32 to vector<16x64xf32>
    %36 = arith.mulf %35, %34 : vector<16x64xf32>
    %cst_19 = arith.constant 4.471500e-02 : f32
    %37 = vector.broadcast %cst_19 : f32 to vector<16x64xf32>
    %38 = arith.mulf %37, %34 : vector<16x64xf32>
    %39 = arith.mulf %38, %34 : vector<16x64xf32>
    %40 = arith.mulf %39, %34 : vector<16x64xf32>
    %41 = arith.addf %34, %40 : vector<16x64xf32>
    %cst_20 = arith.constant 0.797884583 : f32
    %42 = vector.broadcast %cst_20 : f32 to vector<16x64xf32>
    %43 = arith.mulf %42, %41 : vector<16x64xf32>
    %44 = math.tanh %43 : vector<16x64xf32>
    %cst_21 = arith.constant 1.000000e+00 : f32
    %45 = vector.broadcast %cst_21 : f32 to vector<16x64xf32>
    %46 = arith.addf %45, %44 : vector<16x64xf32>
    %47 = arith.mulf %36, %46 : vector<16x64xf32>
    %c80 = arith.constant 80 : index
    %c0_22 = arith.constant 0 : index
    %48 = vector.load %arg3[%c80, %c0_22] : memref<272x32xf32, #tpu.memory_space<vmem>>, vector<64x32xf32>
    %cst_23 = arith.constant dense<0.000000e+00> : vector<16x32xf32>
    %49 = tpu.matmul %47, %48, %cst_23 {dimension_numbers = #tpu.dot_dimension_numbers<[1], [0], [0], [1], [0, 0, 1, 1], [], []>} : vector<16x64xf32>, vector<64x32xf32>, vector<16x32xf32> -> vector<16x32xf32>
    %c144 = arith.constant 144 : index
    %c0_24 = arith.constant 0 : index
    %50 = vector.load %arg3[%c144, %c0_24] : memref<272x32xf32, #tpu.memory_space<vmem>>, vector<1x32xf32>
    %51 = vector.broadcast %50 : vector<1x32xf32> to vector<16x32xf32>
    %52 = arith.addf %49, %51 : vector<16x32xf32>
    %53 = arith.addf %29, %52 : vector<16x32xf32>
    %c152 = arith.constant 152 : index
    %c0_25 = arith.constant 0 : index
    %54 = vector.load %arg3[%c152, %c0_25] : memref<272x32xf32, #tpu.memory_space<vmem>>, vector<1x32xf32>
    %c160 = arith.constant 160 : index
    %c0_26 = arith.constant 0 : index
    %55 = vector.load %arg3[%c160, %c0_26] : memref<272x32xf32, #tpu.memory_space<vmem>>, vector<1x32xf32>
    %cst_27 = arith.constant dense<0.000000e+00> : vector<16xf32>
    %56 = vector.multi_reduction <add>, %53, %cst_27 [1] : vector<16x32xf32> to vector<16xf32>
    %57 = vector.shape_cast %56 : vector<16xf32> to vector<16x1xf32>
    %cst_28 = arith.constant 3.200000e+01 : f32
    %58 = vector.broadcast %cst_28 : f32 to vector<16x1xf32>
    %59 = arith.divf %57, %58 : vector<16x1xf32>
    %60 = vector.broadcast %59 : vector<16x1xf32> to vector<16x32xf32>
    %61 = arith.subf %53, %60 : vector<16x32xf32>
    %62 = arith.mulf %61, %61 : vector<16x32xf32>
    %cst_29 = arith.constant dense<0.000000e+00> : vector<16xf32>
    %63 = vector.multi_reduction <add>, %62, %cst_29 [1] : vector<16x32xf32> to vector<16xf32>
    %64 = vector.shape_cast %63 : vector<16xf32> to vector<16x1xf32>
    %cst_30 = arith.constant 3.200000e+01 : f32
    %65 = vector.broadcast %cst_30 : f32 to vector<16x1xf32>
    %66 = arith.divf %64, %65 : vector<16x1xf32>
    %cst_31 = arith.constant 9.99999974E-6 : f32
    %67 = vector.broadcast %cst_31 : f32 to vector<16x1xf32>
    %68 = arith.addf %66, %67 : vector<16x1xf32>
    %69 = math.rsqrt %68 : vector<16x1xf32>
    %70 = vector.broadcast %69 : vector<16x1xf32> to vector<16x32xf32>
    %71 = arith.mulf %61, %70 : vector<16x32xf32>
    %72 = vector.broadcast %54 : vector<1x32xf32> to vector<16x32xf32>
    %73 = arith.mulf %71, %72 : vector<16x32xf32>
    %74 = vector.broadcast %55 : vector<1x32xf32> to vector<16x32xf32>
    %75 = arith.addf %73, %74 : vector<16x32xf32>
    %cst_32 = arith.constant dense<0.000000e+00> : vector<16x32xf32>
    %76 = tpu.matmul %5, %75, %cst_32 {dimension_numbers = #tpu.dot_dimension_numbers<[1], [0], [0], [1], [0, 0, 1, 1], [], []>} : vector<16x16xf32>, vector<16x32xf32>, vector<16x32xf32> -> vector<16x32xf32>
    %77 = arith.addf %75, %76 : vector<16x32xf32>
    %c168 = arith.constant 168 : index
    %c0_33 = arith.constant 0 : index
    %78 = vector.load %arg3[%c168, %c0_33] : memref<272x32xf32, #tpu.memory_space<vmem>>, vector<1x32xf32>
    %c176 = arith.constant 176 : index
    %c0_34 = arith.constant 0 : index
    %79 = vector.load %arg3[%c176, %c0_34] : memref<272x32xf32, #tpu.memory_space<vmem>>, vector<1x32xf32>
    %cst_35 = arith.constant dense<0.000000e+00> : vector<16xf32>
    %80 = vector.multi_reduction <add>, %77, %cst_35 [1] : vector<16x32xf32> to vector<16xf32>
    %81 = vector.shape_cast %80 : vector<16xf32> to vector<16x1xf32>
    %cst_36 = arith.constant 3.200000e+01 : f32
    %82 = vector.broadcast %cst_36 : f32 to vector<16x1xf32>
    %83 = arith.divf %81, %82 : vector<16x1xf32>
    %84 = vector.broadcast %83 : vector<16x1xf32> to vector<16x32xf32>
    %85 = arith.subf %77, %84 : vector<16x32xf32>
    %86 = arith.mulf %85, %85 : vector<16x32xf32>
    %cst_37 = arith.constant dense<0.000000e+00> : vector<16xf32>
    %87 = vector.multi_reduction <add>, %86, %cst_37 [1] : vector<16x32xf32> to vector<16xf32>
    %88 = vector.shape_cast %87 : vector<16xf32> to vector<16x1xf32>
    %cst_38 = arith.constant 3.200000e+01 : f32
    %89 = vector.broadcast %cst_38 : f32 to vector<16x1xf32>
    %90 = arith.divf %88, %89 : vector<16x1xf32>
    %cst_39 = arith.constant 9.99999974E-6 : f32
    %91 = vector.broadcast %cst_39 : f32 to vector<16x1xf32>
    %92 = arith.addf %90, %91 : vector<16x1xf32>
    %93 = math.rsqrt %92 : vector<16x1xf32>
    %94 = vector.broadcast %93 : vector<16x1xf32> to vector<16x32xf32>
    %95 = arith.mulf %85, %94 : vector<16x32xf32>
    %96 = vector.broadcast %78 : vector<1x32xf32> to vector<16x32xf32>
    %97 = arith.mulf %95, %96 : vector<16x32xf32>
    %98 = vector.broadcast %79 : vector<1x32xf32> to vector<16x32xf32>
    %99 = arith.addf %97, %98 : vector<16x32xf32>
    %c40 = arith.constant 40 : index
    %c0_40 = arith.constant 0 : index
    %100 = vector.load %arg4[%c40, %c0_40] : memref<80x64xf32, #tpu.memory_space<vmem>>, vector<32x64xf32>
    %cst_41 = arith.constant dense<0.000000e+00> : vector<16x64xf32>
    %101 = tpu.matmul %99, %100, %cst_41 {dimension_numbers = #tpu.dot_dimension_numbers<[1], [0], [0], [1], [0, 0, 1, 1], [], []>} : vector<16x32xf32>, vector<32x64xf32>, vector<16x64xf32> -> vector<16x64xf32>
    %c72_42 = arith.constant 72 : index
    %c0_43 = arith.constant 0 : index
    %102 = vector.load %arg4[%c72_42, %c0_43] : memref<80x64xf32, #tpu.memory_space<vmem>>, vector<1x64xf32>
    %103 = vector.broadcast %102 : vector<1x64xf32> to vector<16x64xf32>
    %104 = arith.addf %101, %103 : vector<16x64xf32>
    %cst_44 = arith.constant 5.000000e-01 : f32
    %105 = vector.broadcast %cst_44 : f32 to vector<16x64xf32>
    %106 = arith.mulf %105, %104 : vector<16x64xf32>
    %cst_45 = arith.constant 4.471500e-02 : f32
    %107 = vector.broadcast %cst_45 : f32 to vector<16x64xf32>
    %108 = arith.mulf %107, %104 : vector<16x64xf32>
    %109 = arith.mulf %108, %104 : vector<16x64xf32>
    %110 = arith.mulf %109, %104 : vector<16x64xf32>
    %111 = arith.addf %104, %110 : vector<16x64xf32>
    %cst_46 = arith.constant 0.797884583 : f32
    %112 = vector.broadcast %cst_46 : f32 to vector<16x64xf32>
    %113 = arith.mulf %112, %111 : vector<16x64xf32>
    %114 = math.tanh %113 : vector<16x64xf32>
    %cst_47 = arith.constant 1.000000e+00 : f32
    %115 = vector.broadcast %cst_47 : f32 to vector<16x64xf32>
    %116 = arith.addf %115, %114 : vector<16x64xf32>
    %117 = arith.mulf %106, %116 : vector<16x64xf32>
    %c184 = arith.constant 184 : index
    %c0_48 = arith.constant 0 : index
    %118 = vector.load %arg3[%c184, %c0_48] : memref<272x32xf32, #tpu.memory_space<vmem>>, vector<64x32xf32>
    %cst_49 = arith.constant dense<0.000000e+00> : vector<16x32xf32>
    %119 = tpu.matmul %117, %118, %cst_49 {dimension_numbers = #tpu.dot_dimension_numbers<[1], [0], [0], [1], [0, 0, 1, 1], [], []>} : vector<16x64xf32>, vector<64x32xf32>, vector<16x32xf32> -> vector<16x32xf32>
    %c248 = arith.constant 248 : index
    %c0_50 = arith.constant 0 : index
    %120 = vector.load %arg3[%c248, %c0_50] : memref<272x32xf32, #tpu.memory_space<vmem>>, vector<1x32xf32>
    %121 = vector.broadcast %120 : vector<1x32xf32> to vector<16x32xf32>
    %122 = arith.addf %119, %121 : vector<16x32xf32>
    %123 = arith.addf %99, %122 : vector<16x32xf32>
    %c256 = arith.constant 256 : index
    %c0_51 = arith.constant 0 : index
    %124 = vector.load %arg3[%c256, %c0_51] : memref<272x32xf32, #tpu.memory_space<vmem>>, vector<1x32xf32>
    %c264 = arith.constant 264 : index
    %c0_52 = arith.constant 0 : index
    %125 = vector.load %arg3[%c264, %c0_52] : memref<272x32xf32, #tpu.memory_space<vmem>>, vector<1x32xf32>
    %cst_53 = arith.constant dense<0.000000e+00> : vector<16xf32>
    %126 = vector.multi_reduction <add>, %123, %cst_53 [1] : vector<16x32xf32> to vector<16xf32>
    %127 = vector.shape_cast %126 : vector<16xf32> to vector<16x1xf32>
    %cst_54 = arith.constant 3.200000e+01 : f32
    %128 = vector.broadcast %cst_54 : f32 to vector<16x1xf32>
    %129 = arith.divf %127, %128 : vector<16x1xf32>
    %130 = vector.broadcast %129 : vector<16x1xf32> to vector<16x32xf32>
    %131 = arith.subf %123, %130 : vector<16x32xf32>
    %132 = arith.mulf %131, %131 : vector<16x32xf32>
    %cst_55 = arith.constant dense<0.000000e+00> : vector<16xf32>
    %133 = vector.multi_reduction <add>, %132, %cst_55 [1] : vector<16x32xf32> to vector<16xf32>
    %134 = vector.shape_cast %133 : vector<16xf32> to vector<16x1xf32>
    %cst_56 = arith.constant 3.200000e+01 : f32
    %135 = vector.broadcast %cst_56 : f32 to vector<16x1xf32>
    %136 = arith.divf %134, %135 : vector<16x1xf32>
    %cst_57 = arith.constant 9.99999974E-6 : f32
    %137 = vector.broadcast %cst_57 : f32 to vector<16x1xf32>
    %138 = arith.addf %136, %137 : vector<16x1xf32>
    %139 = math.rsqrt %138 : vector<16x1xf32>
    %140 = vector.broadcast %139 : vector<16x1xf32> to vector<16x32xf32>
    %141 = arith.mulf %131, %140 : vector<16x32xf32>
    %142 = vector.broadcast %124 : vector<1x32xf32> to vector<16x32xf32>
    %143 = arith.mulf %141, %142 : vector<16x32xf32>
    %144 = vector.broadcast %125 : vector<1x32xf32> to vector<16x32xf32>
    %145 = arith.addf %143, %144 : vector<16x32xf32>
    %c24 = arith.constant 24 : index
    %c0_58 = arith.constant 0 : index
    %146 = vector.load %arg3[%c24, %c0_58] : memref<272x32xf32, #tpu.memory_space<vmem>>, vector<32x32xf32>
    %cst_59 = arith.constant dense<0.000000e+00> : vector<16x32xf32>
    %147 = tpu.matmul %145, %146, %cst_59 {dimension_numbers = #tpu.dot_dimension_numbers<[1], [0], [0], [1], [0, 0, 1, 1], [], []>} : vector<16x32xf32>, vector<32x32xf32>, vector<16x32xf32> -> vector<16x32xf32>
    %c56 = arith.constant 56 : index
    %c0_60 = arith.constant 0 : index
    %148 = vector.load %arg3[%c56, %c0_60] : memref<272x32xf32, #tpu.memory_space<vmem>>, vector<1x32xf32>
    %149 = vector.broadcast %148 : vector<1x32xf32> to vector<16x32xf32>
    %150 = arith.addf %147, %149 : vector<16x32xf32>
    %c0_61 = arith.constant 0 : index
    %c0_62 = arith.constant 0 : index
    %151 = vector.load %arg5[%c0_61, %c0_62] : memref<16x32xf32, #tpu.memory_space<vmem>>, vector<16x32xf32>
    tpu.vector_store %arg5[%c0_61, %c0_62], %150 {strides = array<i32>} : memref<16x32xf32, #tpu.memory_space<vmem>>, vector<16x32xf32>,
    return
  }
  func.func @transform_0(%arg0: i32) -> (i32, i32) {
    %c0_i32 = arith.constant 0 : i32
    %c0_i32_0 = arith.constant 0 : i32
    return %arg0, %c0_i32 : i32, i32
  }
  func.func @transform_1(%arg0: i32) -> (i32, i32) {
    %c0_i32 = arith.constant 0 : i32
    %c0_i32_0 = arith.constant 0 : i32
    %c0_i32_1 = arith.constant 0 : i32
    return %c0_i32, %c0_i32_0 : i32, i32
  }
  func.func @transform_2(%arg0: i32) -> (i32, i32) {
    %c0_i32 = arith.constant 0 : i32
    %c0_i32_0 = arith.constant 0 : i32
    %c0_i32_1 = arith.constant 0 : i32
    return %c0_i32, %c0_i32_0 : i32, i32
  }
  func.func @transform_3(%arg0: i32) -> (i32, i32) {
    %c0_i32 = arith.constant 0 : i32
    %c0_i32_0 = arith.constant 0 : i32
    %c0_i32_1 = arith.constant 0 : i32
    return %c0_i32, %c0_i32_0 : i32, i32
  }
  func.func @transform_4(%arg0: i32) -> (i32, i32) {
    %c0_i32 = arith.constant 0 : i32
    %c0_i32_0 = arith.constant 0 : i32
    return %arg0, %c0_i32 : i32, i32
  }
}

</mosaic_0001>

<llo_original>
// kernel: fourier_transformer_forward.1
$region0: #{fourier_transformer_forward.1}
  #allocation0 [shape = 'u32[]', space=smem, size = 0x4, offset = 0x4, fixed_abs, tag = 'smem constant byte address 0x4 - core index']
  #allocation1 [shape = 'u32[144,128]{1,0:T(1,128)}', space=vmem, size = 0x12000, scoped, tag = 'internal scratch']
  %s0 = inlined_call_operand.vmem [shape: f32[32,4], index: 0, kind: input, shape index: {}]
  %s1 = inlined_call_operand.vmem [shape: f32[16,16], index: 1, kind: input, shape index: {}]
  %s2 = inlined_call_operand.vmem [shape: f32[272,32], index: 2, kind: input, shape index: {}]
  %s3 = inlined_call_operand.vmem [shape: f32[80,64], index: 3, kind: input, shape index: {}]
  %s4 = inlined_call_operand.vmem [shape: f32[32,32], index: 4, kind: output, shape index: {}]
  %s5 = sld [smem:[#allocation0]]
  $region49: #{fourier_transformer_forward.1} parent=0
    _
  %s7 = ssub.s32 1, %s5
  %s8 = scalar_select 0, %s7, %s5
  loop: start=0, step=1, limit=4
  $region2: #{fourier_transformer_forward.1} parent=0 // loop_pre_header
    _
  $region3: #{fourier_transformer_forward.1} parent=0 // loop_header
    %s10 = sphi 0, %s14
    %p11 = scmp.ge.s32.totalorder %s10, 4
    %s20 = sphi 0, %s22
    %s23 = sphi 0, %s20
    %s24 = sphi 0, %s23
    %s40 = sphi 0, %s24
    %s44 = sphi 0, %s44
    %s46 = sphi 0, %s44
    %s47 = sphi 0, %s46
    %s61 = sphi 0, %s47
    %s65 = sphi 0, %s65
    %s67 = sphi 0, %s65
    %s68 = sphi 0, %s67
    %s82 = sphi 0, %s68
    %s86 = sphi 0, %s86
    %s88 = sphi 0, %s86
    %s89 = sphi 0, %s88
    %s103 = sphi 0, %s89
    %s109 = sphi 0, %s111
    %s112 = sphi 0, %s109
    %s113 = sphi 0, %s112
    %s129 = sphi 0, %s113
  $region4: #{fourier_transformer_forward.1} parent=0 // loop_header_branch
    %13 = sbr.rel (%p11) target = $region8
  $region5: #{fourier_transformer_forward.1} parent=0 // loop_body
    %s15 = ssub.s32 %s10, 1
    %s16 = ssub.s32 %s10, 2
    %s17 = sadd.s32 %s10, 1
    %s18 = ssub.s32 %s10, %s17
    %p19 = scmp.eq.s32.totalorder %s18, 0
    %s21 = sadd.s32 %s20, 1
    %s22 = scalar_select %p19, %s20, %s21
    %p25 = pneg %p19
    %p26 = scmp.eq.s32.totalorder %s10, 1
    %p27 = por %p25, %p26
    %p28 = scmp.ne.s32.totalorder %s20, %s23
    %p29 = scmp.eq.s32.totalorder %s10, 0
    %p30 = por %p28, %p29
    %p31 = scmp.ne.s32.totalorder %s20, %s23
    %p32 = scmp.eq.s32.totalorder %s15, 1
    %p33 = por %p31, %p32
    %p34 = scmp.ne.s32.totalorder %s23, %s24
    %p35 = scmp.eq.s32.totalorder %s15, 0
    %p36 = por %p34, %p35
    %p37 = scmp.ne.s32.totalorder %s23, %s24
    %p38 = scmp.eq.s32.totalorder %s16, 1
    %p39 = por %p37, %p38
    %p41 = scmp.ne.s32.totalorder %s24, %s40
    %p42 = scmp.eq.s32.totalorder %s16, 0
    %p43 = por %p41, %p42
    %s45 = sadd.s32 %s44, 1
    %p48 = scmp.eq.s32.totalorder %s10, 1
    %p49 = scmp.ne.s32.totalorder %s44, %s46
    %p50 = scmp.eq.s32.totalorder %s10, 0
    %p51 = por %p49, %p50
    %p52 = scmp.ne.s32.totalorder %s44, %s46
    %p53 = scmp.eq.s32.totalorder %s15, 1
    %p54 = por %p52, %p53
    %p55 = scmp.ne.s32.totalorder %s46, %s47
    %p56 = scmp.eq.s32.totalorder %s15, 0
    %p57 = por %p55, %p56
    %p58 = scmp.ne.s32.totalorder %s46, %s47
    %p59 = scmp.eq.s32.totalorder %s16, 1
    %p60 = por %p58, %p59
    %p62 = scmp.ne.s32.totalorder %s47, %s61
    %p63 = scmp.eq.s32.totalorder %s16, 0
    %p64 = por %p62, %p63
    %s66 = sadd.s32 %s65, 1
    %p69 = scmp.eq.s32.totalorder %s10, 1
    %p70 = scmp.ne.s32.totalorder %s65, %s67
    %p71 = scmp.eq.s32.totalorder %s10, 0
    %p72 = por %p70, %p71
    %p73 = scmp.ne.s32.totalorder %s65, %s67
    %p74 = scmp.eq.s32.totalorder %s15, 1
    %p75 = por %p73, %p74
    %p76 = scmp.ne.s32.totalorder %s67, %s68
    %p77 = scmp.eq.s32.totalorder %s15, 0
    %p78 = por %p76, %p77
    %p79 = scmp.ne.s32.totalorder %s67, %s68
    %p80 = scmp.eq.s32.totalorder %s16, 1
    %p81 = por %p79, %p80
    %p83 = scmp.ne.s32.totalorder %s68, %s82
    %p84 = scmp.eq.s32.totalorder %s16, 0
    %p85 = por %p83, %p84
    %s87 = sadd.s32 %s86, 1
    %p90 = scmp.eq.s32.totalorder %s10, 1
    %p91 = scmp.ne.s32.totalorder %s86, %s88
    %p92 = scmp.eq.s32.totalorder %s10, 0
    %p93 = por %p91, %p92
    %p94 = scmp.ne.s32.totalorder %s86, %s88
    %p95 = scmp.eq.s32.totalorder %s15, 1
    %p96 = por %p94, %p95
    %p97 = scmp.ne.s32.totalorder %s88, %s89
    %p98 = scmp.eq.s32.totalorder %s15, 0
    %p99 = por %p97, %p98
    %p100 = scmp.ne.s32.totalorder %s88, %s89
    %p101 = scmp.eq.s32.totalorder %s16, 1
    %p102 = por %p100, %p101
    %p104 = scmp.ne.s32.totalorder %s89, %s103
    %p105 = scmp.eq.s32.totalorder %s16, 0
    %p106 = por %p104, %p105
    %s107 = ssub.s32 %s10, %s17
    %p108 = scmp.eq.s32.totalorder %s107, 0
    %s110 = sadd.s32 %s109, 1
    %s111 = scalar_select %p108, %s109, %s110
    %p114 = pneg %p108
    %p115 = scmp.eq.s32.totalorder %s10, 1
    %p116 = por %p114, %p115
    %p117 = scmp.ne.s32.totalorder %s109, %s112
    %p118 = scmp.eq.s32.totalorder %s10, 0
    %p119 = por %p117, %p118
    %p120 = scmp.ne.s32.totalorder %s109, %s112
    %p121 = scmp.eq.s32.totalorder %s15, 1
    %p122 = por %p120, %p121
    %p123 = scmp.ne.s32.totalorder %s112, %s113
    %p124 = scmp.eq.s32.totalorder %s15, 0
    %p125 = por %p123, %p124
    %p126 = scmp.ne.s32.totalorder %s112, %s113
    %p127 = scmp.eq.s32.totalorder %s16, 1
    %p128 = por %p126, %p127
    %p130 = scmp.ne.s32.totalorder %s113, %s129
    %p131 = scmp.eq.s32.totalorder %s16, 0
    %p132 = por %p130, %p131
    %p133 = scmp.le.s32.totalorder 1, %s10
    %p134 = scmp.lt.s32.totalorder %s10, 3
    %p135 = pnand %p133, %p134
    %p136 = pneg %p135
    // Predicated region
    $region9: #{fourier_transformer_forward.1} parent=5 // pred_check
      _
    $region10: #{fourier_transformer_forward.1} parent=5 // pred_check_branch
      %138 = sbr.rel (%p135) target = $region12
    $region11: #{fourier_transformer_forward.1} parent=5 // pred_region
      %s139 = ssub.s32 %s10, 1
      // Predicated region
      $region13: #{fourier_transformer_forward.1} parent=11 // pred_check
        %p140 = pneg %p57
      $region14: #{fourier_transformer_forward.1} parent=11 // pred_check_branch
        %142 = sbr.rel (%p140) target = $region16
      $region15: #{fourier_transformer_forward.1} parent=11 // pred_region
        _
      $region16: #{fourier_transformer_forward.1} parent=11 // pred_fallthru
        _
      // Predicated region
      $region17: #{fourier_transformer_forward.1} parent=11 // pred_check
        %p143 = pneg %p78
      $region18: #{fourier_transformer_forward.1} parent=11 // pred_check_branch
        %145 = sbr.rel (%p143) target = $region20
      $region19: #{fourier_transformer_forward.1} parent=11 // pred_region
        _
      $region20: #{fourier_transformer_forward.1} parent=11 // pred_fallthru
        _
      // Predicated region
      $region21: #{fourier_transformer_forward.1} parent=11 // pred_check
        %p146 = pneg %p99
      $region22: #{fourier_transformer_forward.1} parent=11 // pred_check_branch
        %148 = sbr.rel (%p146) target = $region24
      $region23: #{fourier_transformer_forward.1} parent=11 // pred_region
        _
      $region24: #{fourier_transformer_forward.1} parent=11 // pred_fallthru
        _
    $region12: #{fourier_transformer_forward.1} parent=5 // pred_fallthru
      _
    %p149 = scmp.lt.s32.totalorder %s10, 2
    // Predicated region
    $region25: #{fourier_transformer_forward.1} parent=5 // pred_check
      %p150 = pneg %p149
    $region26: #{fourier_transformer_forward.1} parent=5 // pred_check_branch
      %152 = sbr.rel (%p150) target = $region28
    $region27: #{fourier_transformer_forward.1} parent=5 // pred_region
      // Predicated region
      $region29: #{fourier_transformer_forward.1} parent=27 // pred_check
        %p153 = pneg %p30
      $region30: #{fourier_transformer_forward.1} parent=27 // pred_check_branch
        %155 = sbr.rel (%p153) target = $region32
      $region31: #{fourier_transformer_forward.1} parent=27 // pred_region
        %s156 = smul.u32 2, %s10
        %p157 = scmp.lt.s32.totalorder %s156, 3
        %s158 = scalar_select %p157, %s156, 3
        %s159 = smul.addr %s158, 8
        %s160 = scalar_lea.vmem %s0, %s159
        %s161 = smul.u32 2, %s10
      $region32: #{fourier_transformer_forward.1} parent=27 // pred_fallthru
        _
    $region28: #{fourier_transformer_forward.1} parent=5 // pred_fallthru
      _
    %p162 = scmp.le.s32.totalorder 1, %s10
    %p163 = scmp.lt.s32.totalorder %s10, 3
    %p164 = pnand %p162, %p163
    %p165 = pneg %p164
    // Predicated region
    $region33: #{fourier_transformer_forward.1} parent=5 // pred_check
      _
    $region34: #{fourier_transformer_forward.1} parent=5 // pred_check_branch
      %167 = sbr.rel (%p164) target = $region36
    $region35: #{fourier_transformer_forward.1} parent=5 // pred_region
      %s168 = ssub.s32 %s10, 1
      %s169 = smul.u32 2, %s15
      %p170 = scmp.lt.s32.totalorder %s169, 3
      %s171 = scalar_select %p170, %s169, 3
      %s172 = smul.addr %s171, 8
      %s173 = scalar_lea.vmem %s0, %s172
      %p174 = pneg %p36
      %p175 = pneg %p33
      %p176 = pneg %p57
      %p177 = pneg %p54
      %p178 = pneg %p78
      %p179 = pneg %p75
      %p180 = pneg %p99
      %p181 = pneg %p96
      %p182 = pneg %p125
      %p183 = pneg %p122
      %s184 = smul.u32 2, %s15
      %p185 = scmp.lt.s32.totalorder %s184, 3
      %s186 = scalar_select %p185, %s184, 3
      %s187 = smul.addr %s186, 8
      %s188 = scalar_lea.vmem %s4, %s187
      %s189 = smul.u32 2, %s15
      %p190 = scmp.lt.s32.totalorder %s189, 3
      %s191 = scalar_select %p190, %s189, 3
      %s192 = smul.addr %s191, 8
      %s193 = scalar_lea.vmem %s0, %s192
      %s194 = smul.u32 2, %s15
      %s195 = smul.u32 2, %s15
      %p196 = scmp.lt.s32.totalorder %s195, 3
      %s197 = scalar_select %p196, %s195, 3
      %s198 = smul.addr %s197, 8
      %s199 = scalar_lea.vmem %s4, %s198
      %s200 = smul.u32 2, %s15
      %v201 = vld [vmem:[%s193] sm:$0xff]
      %v202 = vld [vmem:[%s193 + $0x8] sm:$0xff]
      %v203 = vld [vmem:[%s2] sm:$0xf]
      %v204 = vld [vmem:[%s2 + $0x8] sm:$0xff]
      %v205 = vld [vmem:[%s2 + $0x10] sm:$0xff]
      %vm206 = vcmask 31744
      %v208 = vsel %vm206, %v201, 0
      %v211 = vsel %vm206, %v202, 0
      %vm213 = vcmask 1043456
      %v215 = vsel %vm213, %v203, 0
      %217 = vmatprep.subr.mxu0 0.0
      %218 = vmatpush1.msra.mxu0 %v215
      %219 = vmatprep.subr.mxu0 0.0
      %220 = vmatpush1.msra.mxu0 0.0
      %221 = vmatprep.subr.mxu0 0.0
      %222 = vmatpush1.msra.mxu0 0.0
      %223 = vmatprep.subr.mxu0 0.0
      %224 = vmatpush1.msra.mxu0 0.0
      %225 = vmatprep.subr.mxu0 0.0
      %226 = vmatpush1.msra.mxu0 0.0
      %227 = vmatprep.subr.mxu0 0.0
      %228 = vmatpush1.msra.mxu0 0.0
      %229 = vmatprep.subr.mxu0 0.0
      %230 = vmatpush1.msra.mxu0 0.0
      %231 = vmatprep.subr.mxu0 0.0
      %232 = vmatpush1.msra.mxu0 0.0
      %233 = vmatprep.subr.mxu0 0.0
      %234 = vmatpush1.msra.mxu0 0.0
      %235 = vmatprep.subr.mxu0 0.0
      %236 = vmatpush1.msra.mxu0 0.0
      %237 = vmatprep.subr.mxu0 0.0
      %238 = vmatpush1.msra.mxu0 0.0
      %239 = vmatprep.subr.mxu0 0.0
      %240 = vmatpush1.msra.mxu0 0.0
      %241 = vmatprep.subr.mxu0 0.0
      %242 = vmatpush1.msra.mxu0 0.0
      %243 = vmatprep.subr.mxu0 0.0
      %244 = vmatpush1.msra.mxu0 0.0
      %245 = vmatprep.subr.mxu0 0.0
      %246 = vmatpush1.msra.mxu0 0.0
      %247 = vmatprep.subr.mxu0 0.0
      %248 = vmatpush1.msra.mxu0 0.0
      %249 = vmatprep.subr.mxu0 0.0
      %250 = vmatpush1.msra.mxu0 0.0
      %251 = vmatprep.subr.mxu0 0.0
      %252 = vmatpush1.msra.mxu0 0.0
      %253 = vmatprep.subr.mxu0 0.0
      %254 = vmatpush1.msra.mxu0 0.0
      %255 = vmatprep.subr.mxu0 0.0
      %256 = vmatpush1.msra.mxu0 0.0
      %257 = vmatprep.subr.mxu0 0.0
      %258 = vmatpush1.msra.mxu0 0.0
      %259 = vmatprep.subr.mxu0 0.0
      %260 = vmatpush1.msra.mxu0 0.0
      %261 = vmatprep.subr.mxu0 0.0
      %262 = vmatpush1.msra.mxu0 0.0
      %263 = vmatprep.subr.mxu0 0.0
      %264 = vmatpush1.msra.mxu0 0.0
      %265 = vmatprep.subr.mxu0 0.0
      %266 = vmatpush1.msra.mxu0 0.0
      %267 = vmatprep.subr.mxu0 0.0
      %268 = vmatpush1.msra.mxu0 0.0
      %269 = vmatprep.subr.mxu0 0.0
      %270 = vmatpush1.msra.mxu0 0.0
      %271 = vmatprep.subr.mxu0 0.0
      %272 = vmatpush1.msra.mxu0 0.0
      %273 = vmatprep.subr.mxu0 0.0
      %274 = vmatpush1.msra.mxu0 0.0
      %275 = vmatprep.subr.mxu0 0.0
      %276 = vmatpush1.msra.mxu0 0.0
      %277 = vmatprep.subr.mxu0 0.0
      %278 = vmatpush1.msra.mxu0 0.0
      %279 = vmatprep.subr.mxu0 0.0
      %280 = vmatpush1.msra.mxu0 0.0
      %281 = vmatprep.mubr.f32.mxu0 0.0
      %282 = vmatmul.mubr.f32.gmra.mrb[0].mxu0 %v208
      %v283 = vpop.f32.mrb[0].mxu0
      %v284 = vadd.f32 %v204, %v283
      %v285 = vpop.f32.mrb[0].mxu0
      %286 = vmatprep.mubr.f32.mxu0 0.0
      %287 = vmatmul.mubr.f32.gmra.mrb[0].mxu0 %v211
      %v288 = vpop.f32.mrb[0].mxu0
      %v289 = vadd.f32 %v205, %v288
      %v290 = vpop.f32.mrb[0].mxu0
      %291 = vdwg.mxu0
      %v292 = vld [vmem:[%s1] sm:$0xff]
      %v293 = vld [vmem:[%s1 + $0x8] sm:$0xff]
      %vm294 = vcmask 130048
      %v296 = vsel %vm294, %v292, 0
      %v299 = vsel %vm294, %v293, 0
      %301 = vmatprep.subr.mxu0 0.0
      %302 = vmatpush1.msra.mxu0 %v284
      %303 = vmatprep.subr.mxu0 0.0
      %304 = vmatpush1.msra.mxu0 %v289
      %305 = vmatprep.subr.mxu0 0.0
      %306 = vmatpush1.msra.mxu0 0.0
      %307 = vmatprep.subr.mxu0 0.0
      %308 = vmatpush1.msra.mxu0 0.0
      %309 = vmatprep.subr.mxu0 0.0
      %310 = vmatpush1.msra.mxu0 0.0
      %311 = vmatprep.subr.mxu0 0.0
      %312 = vmatpush1.msra.mxu0 0.0
      %313 = vmatprep.subr.mxu0 0.0
      %314 = vmatpush1.msra.mxu0 0.0
      %315 = vmatprep.subr.mxu0 0.0
      %316 = vmatpush1.msra.mxu0 0.0
      %317 = vmatprep.subr.mxu0 0.0
      %318 = vmatpush1.msra.mxu0 0.0
      %319 = vmatprep.subr.mxu0 0.0
      %320 = vmatpush1.msra.mxu0 0.0
      %321 = vmatprep.subr.mxu0 0.0
      %322 = vmatpush1.msra.mxu0 0.0
      %323 = vmatprep.subr.mxu0 0.0
      %324 = vmatpush1.msra.mxu0 0.0
      %325 = vmatprep.subr.mxu0 0.0
      %326 = vmatpush1.msra.mxu0 0.0
      %327 = vmatprep.subr.mxu0 0.0
      %328 = vmatpush1.msra.mxu0 0.0
      %329 = vmatprep.subr.mxu0 0.0
      %330 = vmatpush1.msra.mxu0 0.0
      %331 = vmatprep.subr.mxu0 0.0
      %332 = vmatpush1.msra.mxu0 0.0
      %333 = vmatprep.subr.mxu0 0.0
      %334 = vmatpush1.msra.mxu0 0.0
      %335 = vmatprep.subr.mxu0 0.0
      %336 = vmatpush1.msra.mxu0 0.0
      %337 = vmatprep.subr.mxu0 0.0
      %338 = vmatpush1.msra.mxu0 0.0
      %339 = vmatprep.subr.mxu0 0.0
      %340 = vmatpush1.msra.mxu0 0.0
      %341 = vmatprep.subr.mxu0 0.0
      %342 = vmatpush1.msra.mxu0 0.0
      %343 = vmatprep.subr.mxu0 0.0
      %344 = vmatpush1.msra.mxu0 0.0
      %345 = vmatprep.subr.mxu0 0.0
      %346 = vmatpush1.msra.mxu0 0.0
      %347 = vmatprep.subr.mxu0 0.0
      %348 = vmatpush1.msra.mxu0 0.0
      %349 = vmatprep.subr.mxu0 0.0
      %350 = vmatpush1.msra.mxu0 0.0
      %351 = vmatprep.subr.mxu0 0.0
      %352 = vmatpush1.msra.mxu0 0.0
      %353 = vmatprep.subr.mxu0 0.0
      %354 = vmatpush1.msra.mxu0 0.0
      %355 = vmatprep.subr.mxu0 0.0
      %356 = vmatpush1.msra.mxu0 0.0
      %357 = vmatprep.subr.mxu0 0.0
      %358 = vmatpush1.msra.mxu0 0.0
      %359 = vmatprep.subr.mxu0 0.0
      %360 = vmatpush1.msra.mxu0 0.0
      %361 = vmatprep.subr.mxu0 0.0
      %362 = vmatpush1.msra.mxu0 0.0
      %363 = vmatprep.subr.mxu0 0.0
      %364 = vmatpush1.msra.mxu0 0.0
      %365 = vmatprep.mubr.f32.mxu0 0.0
      %366 = vmatmul.mubr.f32.gmra.mrb[0].mxu0 %v296
      %v367 = vpop.f32.mrb[0].mxu0
      %v368 = vadd.f32 0.0, %v367
      %v369 = vpop.f32.mrb[0].mxu0
      %370 = vmatprep.mubr.f32.mxu0 0.0
      %371 = vmatmul.mubr.f32.gmra.mrb[0].mxu0 %v299
      %v372 = vpop.f32.mrb[0].mxu0
      %v373 = vadd.f32 0.0, %v372
      %v374 = vpop.f32.mrb[0].mxu0
      %375 = vdwg.mxu0
      %v376 = vadd.f32 %v284, %v368
      %v377 = vadd.f32 %v289, %v373
      %v378 = vld [vmem:[%s2 + $0x40] sm:$0x1]
      %v379 = vld [vmem:[%s2 + $0x48] sm:$0x1]
      %vm380 = vcmask 261120
      %v381 = vsel %vm380, %v376, 0.0
      %382 = vadd.xlane.f32.xlu0 %v381
      %v383 = vpop.xlane.xlu0 %382
      %v384 = vsel %vm380, %v377, 0.0
      %385 = vadd.xlane.f32.xlu0 %v384
      %v386 = vpop.xlane.xlu0 %385
      %v387 = vrcp.pop 32.0
      %v388 = vmul.f32 %v383, %v387
      %v389 = vmul.f32 %v386, %v387
      %v390 = vsub.f32 %v376, %v388
      %v391 = vsub.f32 %v377, %v389
      %v392 = vmul.f32 %v390, %v390
      %v393 = vmul.f32 %v391, %v391
      %v394 = vsel %vm380, %v392, 0.0
      %395 = vadd.xlane.f32.xlu0 %v394
      %v396 = vpop.xlane.xlu0 %395
      %v397 = vsel %vm380, %v393, 0.0
      %398 = vadd.xlane.f32.xlu0 %v397
      %v399 = vpop.xlane.xlu0 %398
      %v400 = vmul.f32 %v396, %v387
      %v401 = vmul.f32 %v399, %v387
      %v402 = vadd.f32 %v400, 1e-05
      %v403 = vadd.f32 %v401, 1e-05
      %v404 = vrsqrt.pop %v402
      %v405 = vrsqrt.pop %v403
      %v406 = vmul.f32 %v390, %v404
      %v407 = vmul.f32 %v391, %v405
      %v408 = vlaneseq
      %v409 = vshrl.u32 %v408, 7
      %v410 = vsub.s32 0, %v409
      %v411 = vrot.slane %v378, %v410
      %v412 = vmul.f32 %v406, %v411
      %v413 = vmul.f32 %v407, %v411
      %v414 = vlaneseq
      %v415 = vshrl.u32 %v414, 7
      %v416 = vsub.s32 0, %v415
      %v417 = vrot.slane %v379, %v416
      %v418 = vadd.f32 %v412, %v417
      %v419 = vadd.f32 %v413, %v417
      %v420 = vld [vmem:[%s3] sm:$0xff]
      %v421 = vld [vmem:[%s3 + $0x8] sm:$0xff]
      %v422 = vld [vmem:[%s3 + $0x10] sm:$0xff]
      %v423 = vld [vmem:[%s3 + $0x18] sm:$0xff]
      %v424 = vld [vmem:[%s3 + $0x20] sm:$0x1]
      %v425 = vlaneseq
      %v426 = vshrl.u32 %v425, 7
      %v427 = vsub.s32 0, %v426
      %v428 = vrot.slane %v424, %v427
      %v430 = vsel %vm380, %v418, 0
      %v433 = vsel %vm380, %v419, 0
      %435 = vmatprep.subr.mxu0 0.0
      %436 = vmatpush1.msra.mxu0 %v420
      %437 = vmatprep.subr.mxu0 0.0
      %438 = vmatpush1.msra.mxu0 %v421
      %439 = vmatprep.subr.mxu0 0.0
      %440 = vmatpush1.msra.mxu0 %v422
      %441 = vmatprep.subr.mxu0 0.0
      %442 = vmatpush1.msra.mxu0 %v423
      %443 = vmatprep.subr.mxu0 0.0
      %444 = vmatpush1.msra.mxu0 0.0
      %445 = vmatprep.subr.mxu0 0.0
      %446 = vmatpush1.msra.mxu0 0.0
      %447 = vmatprep.subr.mxu0 0.0
      %448 = vmatpush1.msra.mxu0 0.0
      %449 = vmatprep.subr.mxu0 0.0
      %450 = vmatpush1.msra.mxu0 0.0
      %451 = vmatprep.subr.mxu0 0.0
      %452 = vmatpush1.msra.mxu0 0.0
      %453 = vmatprep.subr.mxu0 0.0
      %454 = vmatpush1.msra.mxu0 0.0
      %455 = vmatprep.subr.mxu0 0.0
      %456 = vmatpush1.msra.mxu0 0.0
      %457 = vmatprep.subr.mxu0 0.0
      %458 = vmatpush1.msra.mxu0 0.0
      %459 = vmatprep.subr.mxu0 0.0
      %460 = vmatpush1.msra.mxu0 0.0
      %461 = vmatprep.subr.mxu0 0.0
      %462 = vmatpush1.msra.mxu0 0.0
      %463 = vmatprep.subr.mxu0 0.0
      %464 = vmatpush1.msra.mxu0 0.0
      %465 = vmatprep.subr.mxu0 0.0
      %466 = vmatpush1.msra.mxu0 0.0
      %467 = vmatprep.subr.mxu0 0.0
      %468 = vmatpush1.msra.mxu0 0.0
      %469 = vmatprep.subr.mxu0 0.0
      %470 = vmatpush1.msra.mxu0 0.0
      %471 = vmatprep.subr.mxu0 0.0
      %472 = vmatpush1.msra.mxu0 0.0
      %473 = vmatprep.subr.mxu0 0.0
      %474 = vmatpush1.msra.mxu0 0.0
      %475 = vmatprep.subr.mxu0 0.0
      %476 = vmatpush1.msra.mxu0 0.0
      %477 = vmatprep.subr.mxu0 0.0
      %478 = vmatpush1.msra.mxu0 0.0
      %479 = vmatprep.subr.mxu0 0.0
      %480 = vmatpush1.msra.mxu0 0.0
      %481 = vmatprep.subr.mxu0 0.0
      %482 = vmatpush1.msra.mxu0 0.0
      %483 = vmatprep.subr.mxu0 0.0
      %484 = vmatpush1.msra.mxu0 0.0
      %485 = vmatprep.subr.mxu0 0.0
      %486 = vmatpush1.msra.mxu0 0.0
      %487 = vmatprep.subr.mxu0 0.0
      %488 = vmatpush1.msra.mxu0 0.0
      %489 = vmatprep.subr.mxu0 0.0
      %490 = vmatpush1.msra.mxu0 0.0
      %491 = vmatprep.subr.mxu0 0.0
      %492 = vmatpush1.msra.mxu0 0.0
      %493 = vmatprep.subr.mxu0 0.0
      %494 = vmatpush1.msra.mxu0 0.0
      %495 = vmatprep.subr.mxu0 0.0
      %496 = vmatpush1.msra.mxu0 0.0
      %497 = vmatprep.subr.mxu0 0.0
      %498 = vmatpush1.msra.mxu0 0.0
      %499 = vmatprep.mubr.f32.mxu0 0.0
      %500 = vmatmul.mubr.f32.gmra.mrb[0].mxu0 %v430
      %v501 = vpop.f32.mrb[0].mxu0
      %v502 = vadd.f32 %v428, %v501
      %v503 = vpop.f32.mrb[0].mxu0
      %504 = vmatprep.mubr.f32.mxu0 0.0
      %505 = vmatmul.mubr.f32.gmra.mrb[0].mxu0 %v433
      %v506 = vpop.f32.mrb[0].mxu0
      %v507 = vadd.f32 %v428, %v506
      %v508 = vpop.f32.mrb[0].mxu0
      %509 = vdwg.mxu0
      %v510 = vmul.f32 %v502, 0.5
      %v511 = vmul.f32 %v507, 0.5
      %v512 = vmul.f32 %v502, 0.044715
      %v513 = vmul.f32 %v507, 0.044715
      %v514 = vmul.f32 %v512, %v502
      %v515 = vmul.f32 %v513, %v507
      %v516 = vmul.f32 %v514, %v502
      %v517 = vmul.f32 %v515, %v507
      %v518 = vadd.f32 %v502, %v516
      %v519 = vadd.f32 %v507, %v517
      %v520 = vmul.f32 %v518, 0.7978846
      %v521 = vmul.f32 %v519, 0.7978846
      %v522 = vtanh.pop %v520
      %v523 = vtanh.pop %v521
      %v524 = vadd.f32 %v522, 1.0
      %v525 = vadd.f32 %v523, 1.0
      %v526 = vmul.f32 %v510, %v524
      %v527 = vmul.f32 %v511, %v525
      %v528 = vld [vmem:[%s2 + $0x50] sm:$0xff]
      %v529 = vld [vmem:[%s2 + $0x58] sm:$0xff]
      %v530 = vld [vmem:[%s2 + $0x60] sm:$0xff]
      %v531 = vld [vmem:[%s2 + $0x68] sm:$0xff]
      %v532 = vld [vmem:[%s2 + $0x70] sm:$0xff]
      %v533 = vld [vmem:[%s2 + $0x78] sm:$0xff]
      %v534 = vld [vmem:[%s2 + $0x80] sm:$0xff]
      %v535 = vld [vmem:[%s2 + $0x88] sm:$0xff]
      %v536 = vld [vmem:[%s2 + $0x90] sm:$0x1]
      %v537 = vlaneseq
      %v538 = vshrl.u32 %v537, 7
      %v539 = vsub.s32 0, %v538
      %v540 = vrot.slane %v536, %v539
      %vm541 = vcmask 523264
      %v543 = vsel %vm541, %v526, 0
      %v546 = vsel %vm541, %v527, 0
      %548 = vmatprep.subr.mxu0 0.0
      %549 = vmatpush1.msra.mxu0 %v528
      %550 = vmatprep.subr.mxu0 0.0
      %551 = vmatpush1.msra.mxu0 %v529
      %552 = vmatprep.subr.mxu0 0.0
      %553 = vmatpush1.msra.mxu0 %v530
      %554 = vmatprep.subr.mxu0 0.0
      %555 = vmatpush1.msra.mxu0 %v531
      %556 = vmatprep.subr.mxu0 0.0
      %557 = vmatpush1.msra.mxu0 %v532
      %558 = vmatprep.subr.mxu0 0.0
      %559 = vmatpush1.msra.mxu0 %v533
      %560 = vmatprep.subr.mxu0 0.0
      %561 = vmatpush1.msra.mxu0 %v534
      %562 = vmatprep.subr.mxu0 0.0
      %563 = vmatpush1.msra.mxu0 %v535
      %564 = vmatprep.subr.mxu0 0.0
      %565 = vmatpush1.msra.mxu0 0.0
      %566 = vmatprep.subr.mxu0 0.0
      %567 = vmatpush1.msra.mxu0 0.0
      %568 = vmatprep.subr.mxu0 0.0
      %569 = vmatpush1.msra.mxu0 0.0
      %570 = vmatprep.subr.mxu0 0.0
      %571 = vmatpush1.msra.mxu0 0.0
      %572 = vmatprep.subr.mxu0 0.0
      %573 = vmatpush1.msra.mxu0 0.0
      %574 = vmatprep.subr.mxu0 0.0
      %575 = vmatpush1.msra.mxu0 0.0
      %576 = vmatprep.subr.mxu0 0.0
      %577 = vmatpush1.msra.mxu0 0.0
      %578 = vmatprep.subr.mxu0 0.0
      %579 = vmatpush1.msra.mxu0 0.0
      %580 = vmatprep.subr.mxu0 0.0
      %581 = vmatpush1.msra.mxu0 0.0
      %582 = vmatprep.subr.mxu0 0.0
      %583 = vmatpush1.msra.mxu0 0.0
      %584 = vmatprep.subr.mxu0 0.0
      %585 = vmatpush1.msra.mxu0 0.0
      %586 = vmatprep.subr.mxu0 0.0
      %587 = vmatpush1.msra.mxu0 0.0
      %588 = vmatprep.subr.mxu0 0.0
      %589 = vmatpush1.msra.mxu0 0.0
      %590 = vmatprep.subr.mxu0 0.0
      %591 = vmatpush1.msra.mxu0 0.0
      %592 = vmatprep.subr.mxu0 0.0
      %593 = vmatpush1.msra.mxu0 0.0
      %594 = vmatprep.subr.mxu0 0.0
      %595 = vmatpush1.msra.mxu0 0.0
      %596 = vmatprep.subr.mxu0 0.0
      %597 = vmatpush1.msra.mxu0 0.0
      %598 = vmatprep.subr.mxu0 0.0
      %599 = vmatpush1.msra.mxu0 0.0
      %600 = vmatprep.subr.mxu0 0.0
      %601 = vmatpush1.msra.mxu0 0.0
      %602 = vmatprep.subr.mxu0 0.0
      %603 = vmatpush1.msra.mxu0 0.0
      %604 = vmatprep.subr.mxu0 0.0
      %605 = vmatpush1.msra.mxu0 0.0
      %606 = vmatprep.subr.mxu0 0.0
      %607 = vmatpush1.msra.mxu0 0.0
      %608 = vmatprep.subr.mxu0 0.0
      %609 = vmatpush1.msra.mxu0 0.0
      %610 = vmatprep.subr.mxu0 0.0
      %611 = vmatpush1.msra.mxu0 0.0
      %612 = vmatprep.mubr.f32.mxu0 0.0
      %613 = vmatmul.mubr.f32.gmra.mrb[0].mxu0 %v543
      %v614 = vpop.f32.mrb[0].mxu0
      %v615 = vadd.f32 %v540, %v614
      %v616 = vpop.f32.mrb[0].mxu0
      %617 = vmatprep.mubr.f32.mxu0 0.0
      %618 = vmatmul.mubr.f32.gmra.mrb[0].mxu0 %v546
      %v619 = vpop.f32.mrb[0].mxu0
      %v620 = vadd.f32 %v540, %v619
      %v621 = vpop.f32.mrb[0].mxu0
      %622 = vdwg.mxu0
      %v623 = vadd.f32 %v418, %v615
      %v624 = vadd.f32 %v419, %v620
      %v625 = vld [vmem:[%s2 + $0x98] sm:$0x1]
      %v626 = vld [vmem:[%s2 + $0xa0] sm:$0x1]
      %v627 = vsel %vm380, %v623, 0.0
      %628 = vadd.xlane.f32.xlu0 %v627
      %v629 = vpop.xlane.xlu0 %628
      %v630 = vsel %vm380, %v624, 0.0
      %631 = vadd.xlane.f32.xlu0 %v630
      %v632 = vpop.xlane.xlu0 %631
      %v633 = vmul.f32 %v629, %v387
      %v634 = vmul.f32 %v632, %v387
      %v635 = vsub.f32 %v623, %v633
      %v636 = vsub.f32 %v624, %v634
      %v637 = vmul.f32 %v635, %v635
      %v638 = vmul.f32 %v636, %v636
      %v639 = vsel %vm380, %v637, 0.0
      %640 = vadd.xlane.f32.xlu0 %v639
      %v641 = vpop.xlane.xlu0 %640
      %v642 = vsel %vm380, %v638, 0.0
      %643 = vadd.xlane.f32.xlu0 %v642
      %v644 = vpop.xlane.xlu0 %643
      %v645 = vmul.f32 %v641, %v387
      %v646 = vmul.f32 %v644, %v387
      %v647 = vadd.f32 %v645, 1e-05
      %v648 = vadd.f32 %v646, 1e-05
      %v649 = vrsqrt.pop %v647
      %v650 = vrsqrt.pop %v648
      %v651 = vmul.f32 %v635, %v649
      %v652 = vmul.f32 %v636, %v650
      %v653 = vlaneseq
      %v654 = vshrl.u32 %v653, 7
      %v655 = vsub.s32 0, %v654
      %v656 = vrot.slane %v625, %v655
      %v657 = vmul.f32 %v651, %v656
      %v658 = vmul.f32 %v652, %v656
      %v659 = vlaneseq
      %v660 = vshrl.u32 %v659, 7
      %v661 = vsub.s32 0, %v660
      %v662 = vrot.slane %v626, %v661
      %v663 = vadd.f32 %v657, %v662
      %v664 = vadd.f32 %v658, %v662
      %665 = vmatprep.subr.mxu0 0.0
      %666 = vmatpush1.msra.mxu0 %v663
      %667 = vmatprep.subr.mxu0 0.0
      %668 = vmatpush1.msra.mxu0 %v664
      %669 = vmatprep.subr.mxu0 0.0
      %670 = vmatpush1.msra.mxu0 0.0
      %671 = vmatprep.subr.mxu0 0.0
      %672 = vmatpush1.msra.mxu0 0.0
      %673 = vmatprep.subr.mxu0 0.0
      %674 = vmatpush1.msra.mxu0 0.0
      %675 = vmatprep.subr.mxu0 0.0
      %676 = vmatpush1.msra.mxu0 0.0
      %677 = vmatprep.subr.mxu0 0.0
      %678 = vmatpush1.msra.mxu0 0.0
      %679 = vmatprep.subr.mxu0 0.0
      %680 = vmatpush1.msra.mxu0 0.0
      %681 = vmatprep.subr.mxu0 0.0
      %682 = vmatpush1.msra.mxu0 0.0
      %683 = vmatprep.subr.mxu0 0.0
      %684 = vmatpush1.msra.mxu0 0.0
      %685 = vmatprep.subr.mxu0 0.0
      %686 = vmatpush1.msra.mxu0 0.0
      %687 = vmatprep.subr.mxu0 0.0
      %688 = vmatpush1.msra.mxu0 0.0
      %689 = vmatprep.subr.mxu0 0.0
      %690 = vmatpush1.msra.mxu0 0.0
      %691 = vmatprep.subr.mxu0 0.0
      %692 = vmatpush1.msra.mxu0 0.0
      %693 = vmatprep.subr.mxu0 0.0
      %694 = vmatpush1.msra.mxu0 0.0
      %695 = vmatprep.subr.mxu0 0.0
      %696 = vmatpush1.msra.mxu0 0.0
      %697 = vmatprep.subr.mxu0 0.0
      %698 = vmatpush1.msra.mxu0 0.0
      %699 = vmatprep.subr.mxu0 0.0
      %700 = vmatpush1.msra.mxu0 0.0
      %701 = vmatprep.subr.mxu0 0.0
      %702 = vmatpush1.msra.mxu0 0.0
      %703 = vmatprep.subr.mxu0 0.0
      %704 = vmatpush1.msra.mxu0 0.0
      %705 = vmatprep.subr.mxu0 0.0
      %706 = vmatpush1.msra.mxu0 0.0
      %707 = vmatprep.subr.mxu0 0.0
      %708 = vmatpush1.msra.mxu0 0.0
      %709 = vmatprep.subr.mxu0 0.0
      %710 = vmatpush1.msra.mxu0 0.0
      %711 = vmatprep.subr.mxu0 0.0
      %712 = vmatpush1.msra.mxu0 0.0
      %713 = vmatprep.subr.mxu0 0.0
      %714 = vmatpush1.msra.mxu0 0.0
      %715 = vmatprep.subr.mxu0 0.0
      %716 = vmatpush1.msra.mxu0 0.0
      %717 = vmatprep.subr.mxu0 0.0
      %718 = vmatpush1.msra.mxu0 0.0
      %719 = vmatprep.subr.mxu0 0.0
      %720 = vmatpush1.msra.mxu0 0.0
      %721 = vmatprep.subr.mxu0 0.0
      %722 = vmatpush1.msra.mxu0 0.0
      %723 = vmatprep.subr.mxu0 0.0
      %724 = vmatpush1.msra.mxu0 0.0
      %725 = vmatprep.subr.mxu0 0.0
      %726 = vmatpush1.msra.mxu0 0.0
      %727 = vmatprep.subr.mxu0 0.0
      %728 = vmatpush1.msra.mxu0 0.0
      %729 = vmatprep.mubr.f32.mxu0 0.0
      %730 = vmatmul.mubr.f32.gmra.mrb[0].mxu0 %v296
      %v731 = vpop.f32.mrb[0].mxu0
      %v732 = vadd.f32 0.0, %v731
      %v733 = vpop.f32.mrb[0].mxu0
      %734 = vmatprep.mubr.f32.mxu0 0.0
      %735 = vmatmul.mubr.f32.gmra.mrb[0].mxu0 %v299
      %v736 = vpop.f32.mrb[0].mxu0
      %v737 = vadd.f32 0.0, %v736
      %v738 = vpop.f32.mrb[0].mxu0
      %739 = vdwg.mxu0
      %v740 = vadd.f32 %v663, %v732
      %v741 = vadd.f32 %v664, %v737
      %v742 = vld [vmem:[%s2 + $0xa8] sm:$0x1]
      %v743 = vld [vmem:[%s2 + $0xb0] sm:$0x1]
      %v744 = vsel %vm380, %v740, 0.0
      %745 = vadd.xlane.f32.xlu0 %v744
      %v746 = vpop.xlane.xlu0 %745
      %v747 = vsel %vm380, %v741, 0.0
      %748 = vadd.xlane.f32.xlu0 %v747
      %v749 = vpop.xlane.xlu0 %748
      %v750 = vmul.f32 %v746, %v387
      %v751 = vmul.f32 %v749, %v387
      %v752 = vsub.f32 %v740, %v750
      %v753 = vsub.f32 %v741, %v751
      %v754 = vmul.f32 %v752, %v752
      %v755 = vmul.f32 %v753, %v753
      %v756 = vsel %vm380, %v754, 0.0
      %757 = vadd.xlane.f32.xlu0 %v756
      %v758 = vpop.xlane.xlu0 %757
      %v759 = vsel %vm380, %v755, 0.0
      %760 = vadd.xlane.f32.xlu0 %v759
      %v761 = vpop.xlane.xlu0 %760
      %v762 = vmul.f32 %v758, %v387
      %v763 = vmul.f32 %v761, %v387
      %v764 = vadd.f32 %v762, 1e-05
      %v765 = vadd.f32 %v763, 1e-05
      %v766 = vrsqrt.pop %v764
      %v767 = vrsqrt.pop %v765
      %v768 = vmul.f32 %v752, %v766
      %v769 = vmul.f32 %v753, %v767
      %v770 = vlaneseq
      %v771 = vshrl.u32 %v770, 7
      %v772 = vsub.s32 0, %v771
      %v773 = vrot.slane %v742, %v772
      %v774 = vmul.f32 %v768, %v773
      %v775 = vmul.f32 %v769, %v773
      %v776 = vlaneseq
      %v777 = vshrl.u32 %v776, 7
      %v778 = vsub.s32 0, %v777
      %v779 = vrot.slane %v743, %v778
      %v780 = vadd.f32 %v774, %v779
      %v781 = vadd.f32 %v775, %v779
      %v782 = vld [vmem:[%s3 + $0x28] sm:$0xff]
      %v783 = vld [vmem:[%s3 + $0x30] sm:$0xff]
      %v784 = vld [vmem:[%s3 + $0x38] sm:$0xff]
      %v785 = vld [vmem:[%s3 + $0x40] sm:$0xff]
      %v786 = vld [vmem:[%s3 + $0x48] sm:$0x1]
      %v787 = vlaneseq
      %v788 = vshrl.u32 %v787, 7
      %v789 = vsub.s32 0, %v788
      %v790 = vrot.slane %v786, %v789
      %v792 = vsel %vm380, %v780, 0
      %v795 = vsel %vm380, %v781, 0
      %797 = vmatprep.subr.mxu0 0.0
      %798 = vmatpush1.msra.mxu0 %v782
      %799 = vmatprep.subr.mxu0 0.0
      %800 = vmatpush1.msra.mxu0 %v783
      %801 = vmatprep.subr.mxu0 0.0
      %802 = vmatpush1.msra.mxu0 %v784
      %803 = vmatprep.subr.mxu0 0.0
      %804 = vmatpush1.msra.mxu0 %v785
      %805 = vmatprep.subr.mxu0 0.0
      %806 = vmatpush1.msra.mxu0 0.0
      %807 = vmatprep.subr.mxu0 0.0
      %808 = vmatpush1.msra.mxu0 0.0
      %809 = vmatprep.subr.mxu0 0.0
      %810 = vmatpush1.msra.mxu0 0.0
      %811 = vmatprep.subr.mxu0 0.0
      %812 = vmatpush1.msra.mxu0 0.0
      %813 = vmatprep.subr.mxu0 0.0
      %814 = vmatpush1.msra.mxu0 0.0
      %815 = vmatprep.subr.mxu0 0.0
      %816 = vmatpush1.msra.mxu0 0.0
      %817 = vmatprep.subr.mxu0 0.0
      %818 = vmatpush1.msra.mxu0 0.0
      %819 = vmatprep.subr.mxu0 0.0
      %820 = vmatpush1.msra.mxu0 0.0
      %821 = vmatprep.subr.mxu0 0.0
      %822 = vmatpush1.msra.mxu0 0.0
      %823 = vmatprep.subr.mxu0 0.0
      %824 = vmatpush1.msra.mxu0 0.0
      %825 = vmatprep.subr.mxu0 0.0
      %826 = vmatpush1.msra.mxu0 0.0
      %827 = vmatprep.subr.mxu0 0.0
      %828 = vmatpush1.msra.mxu0 0.0
      %829 = vmatprep.subr.mxu0 0.0
      %830 = vmatpush1.msra.mxu0 0.0
      %831 = vmatprep.subr.mxu0 0.0
      %832 = vmatpush1.msra.mxu0 0.0
      %833 = vmatprep.subr.mxu0 0.0
      %834 = vmatpush1.msra.mxu0 0.0
      %835 = vmatprep.subr.mxu0 0.0
      %836 = vmatpush1.msra.mxu0 0.0
      %837 = vmatprep.subr.mxu0 0.0
      %838 = vmatpush1.msra.mxu0 0.0
      %839 = vmatprep.subr.mxu0 0.0
      %840 = vmatpush1.msra.mxu0 0.0
      %841 = vmatprep.subr.mxu0 0.0
      %842 = vmatpush1.msra.mxu0 0.0
      %843 = vmatprep.subr.mxu0 0.0
      %844 = vmatpush1.msra.mxu0 0.0
      %845 = vmatprep.subr.mxu0 0.0
      %846 = vmatpush1.msra.mxu0 0.0
      %847 = vmatprep.subr.mxu0 0.0
      %848 = vmatpush1.msra.mxu0 0.0
      %849 = vmatprep.subr.mxu0 0.0
      %850 = vmatpush1.msra.mxu0 0.0
      %851 = vmatprep.subr.mxu0 0.0
      %852 = vmatpush1.msra.mxu0 0.0
      %853 = vmatprep.subr.mxu0 0.0
      %854 = vmatpush1.msra.mxu0 0.0
      %855 = vmatprep.subr.mxu0 0.0
      %856 = vmatpush1.msra.mxu0 0.0
      %857 = vmatprep.subr.mxu0 0.0
      %858 = vmatpush1.msra.mxu0 0.0
      %859 = vmatprep.subr.mxu0 0.0
      %860 = vmatpush1.msra.mxu0 0.0
      %861 = vmatprep.mubr.f32.mxu0 0.0
      %862 = vmatmul.mubr.f32.gmra.mrb[0].mxu0 %v792
      %v863 = vpop.f32.mrb[0].mxu0
      %v864 = vadd.f32 %v790, %v863
      %v865 = vpop.f32.mrb[0].mxu0
      %866 = vmatprep.mubr.f32.mxu0 0.0
      %867 = vmatmul.mubr.f32.gmra.mrb[0].mxu0 %v795
      %v868 = vpop.f32.mrb[0].mxu0
      %v869 = vadd.f32 %v790, %v868
      %v870 = vpop.f32.mrb[0].mxu0
      %871 = vdwg.mxu0
      %v872 = vmul.f32 %v864, 0.5
      %v873 = vmul.f32 %v869, 0.5
      %v874 = vmul.f32 %v864, 0.044715
      %v875 = vmul.f32 %v869, 0.044715
      %v876 = vmul.f32 %v874, %v864
      %v877 = vmul.f32 %v875, %v869
      %v878 = vmul.f32 %v876, %v864
      %v879 = vmul.f32 %v877, %v869
      %v880 = vadd.f32 %v864, %v878
      %v881 = vadd.f32 %v869, %v879
      %v882 = vmul.f32 %v880, 0.7978846
      %v883 = vmul.f32 %v881, 0.7978846
      %v884 = vtanh.pop %v882
      %v885 = vtanh.pop %v883
      %v886 = vadd.f32 %v884, 1.0
      %v887 = vadd.f32 %v885, 1.0
      %v888 = vmul.f32 %v872, %v886
      %v889 = vmul.f32 %v873, %v887
      %v890 = vld [vmem:[%s2 + $0xb8] sm:$0xff]
      %v891 = vld [vmem:[%s2 + $0xc0] sm:$0xff]
      %v892 = vld [vmem:[%s2 + $0xc8] sm:$0xff]
      %v893 = vld [vmem:[%s2 + $0xd0] sm:$0xff]
      %v894 = vld [vmem:[%s2 + $0xd8] sm:$0xff]
      %v895 = vld [vmem:[%s2 + $0xe0] sm:$0xff]
      %v896 = vld [vmem:[%s2 + $0xe8] sm:$0xff]
      %v897 = vld [vmem:[%s2 + $0xf0] sm:$0xff]
      %v898 = vld [vmem:[%s2 + $0xf8] sm:$0x1]
      %v899 = vlaneseq
      %v900 = vshrl.u32 %v899, 7
      %v901 = vsub.s32 0, %v900
      %v902 = vrot.slane %v898, %v901
      %v904 = vsel %vm541, %v888, 0
      %v907 = vsel %vm541, %v889, 0
      %909 = vmatprep.subr.mxu0 0.0
      %910 = vmatpush1.msra.mxu0 %v890
      %911 = vmatprep.subr.mxu0 0.0
      %912 = vmatpush1.msra.mxu0 %v891
      %913 = vmatprep.subr.mxu0 0.0
      %914 = vmatpush1.msra.mxu0 %v892
      %915 = vmatprep.subr.mxu0 0.0
      %916 = vmatpush1.msra.mxu0 %v893
      %917 = vmatprep.subr.mxu0 0.0
      %918 = vmatpush1.msra.mxu0 %v894
      %919 = vmatprep.subr.mxu0 0.0
      %920 = vmatpush1.msra.mxu0 %v895
      %921 = vmatprep.subr.mxu0 0.0
      %922 = vmatpush1.msra.mxu0 %v896
      %923 = vmatprep.subr.mxu0 0.0
      %924 = vmatpush1.msra.mxu0 %v897
      %925 = vmatprep.subr.mxu0 0.0
      %926 = vmatpush1.msra.mxu0 0.0
      %927 = vmatprep.subr.mxu0 0.0
      %928 = vmatpush1.msra.mxu0 0.0
      %929 = vmatprep.subr.mxu0 0.0
      %930 = vmatpush1.msra.mxu0 0.0
      %931 = vmatprep.subr.mxu0 0.0
      %932 = vmatpush1.msra.mxu0 0.0
      %933 = vmatprep.subr.mxu0 0.0
      %934 = vmatpush1.msra.mxu0 0.0
      %935 = vmatprep.subr.mxu0 0.0
      %936 = vmatpush1.msra.mxu0 0.0
      %937 = vmatprep.subr.mxu0 0.0
      %938 = vmatpush1.msra.mxu0 0.0
      %939 = vmatprep.subr.mxu0 0.0
      %940 = vmatpush1.msra.mxu0 0.0
      %941 = vmatprep.subr.mxu0 0.0
      %942 = vmatpush1.msra.mxu0 0.0
      %943 = vmatprep.subr.mxu0 0.0
      %944 = vmatpush1.msra.mxu0 0.0
      %945 = vmatprep.subr.mxu0 0.0
      %946 = vmatpush1.msra.mxu0 0.0
      %947 = vmatprep.subr.mxu0 0.0
      %948 = vmatpush1.msra.mxu0 0.0
      %949 = vmatprep.subr.mxu0 0.0
      %950 = vmatpush1.msra.mxu0 0.0
      %951 = vmatprep.subr.mxu0 0.0
      %952 = vmatpush1.msra.mxu0 0.0
      %953 = vmatprep.subr.mxu0 0.0
      %954 = vmatpush1.msra.mxu0 0.0
      %955 = vmatprep.subr.mxu0 0.0
      %956 = vmatpush1.msra.mxu0 0.0
      %957 = vmatprep.subr.mxu0 0.0
      %958 = vmatpush1.msra.mxu0 0.0
      %959 = vmatprep.subr.mxu0 0.0
      %960 = vmatpush1.msra.mxu0 0.0
      %961 = vmatprep.subr.mxu0 0.0
      %962 = vmatpush1.msra.mxu0 0.0
      %963 = vmatprep.subr.mxu0 0.0
      %964 = vmatpush1.msra.mxu0 0.0
      %965 = vmatprep.subr.mxu0 0.0
      %966 = vmatpush1.msra.mxu0 0.0
      %967 = vmatprep.subr.mxu0 0.0
      %968 = vmatpush1.msra.mxu0 0.0
      %969 = vmatprep.subr.mxu0 0.0
      %970 = vmatpush1.msra.mxu0 0.0
      %971 = vmatprep.subr.mxu0 0.0
      %972 = vmatpush1.msra.mxu0 0.0
      %973 = vmatprep.mubr.f32.mxu0 0.0
      %974 = vmatmul.mubr.f32.gmra.mrb[0].mxu0 %v904
      %v975 = vpop.f32.mrb[0].mxu0
      %v976 = vadd.f32 %v902, %v975
      %v977 = vpop.f32.mrb[0].mxu0
      %978 = vmatprep.mubr.f32.mxu0 0.0
      %979 = vmatmul.mubr.f32.gmra.mrb[0].mxu0 %v907
      %v980 = vpop.f32.mrb[0].mxu0
      %v981 = vadd.f32 %v902, %v980
      %v982 = vpop.f32.mrb[0].mxu0
      %983 = vdwg.mxu0
      %v984 = vadd.f32 %v780, %v976
      %v985 = vadd.f32 %v781, %v981
      %v986 = vld [vmem:[%s2 + $0x100] sm:$0x1]
      %v987 = vld [vmem:[%s2 + $0x108] sm:$0x1]
      %v988 = vsel %vm380, %v984, 0.0
      %989 = vadd.xlane.f32.xlu0 %v988
      %v990 = vpop.xlane.xlu0 %989
      %v991 = vsel %vm380, %v985, 0.0
      %992 = vadd.xlane.f32.xlu0 %v991
      %v993 = vpop.xlane.xlu0 %992
      %v994 = vmul.f32 %v990, %v387
      %v995 = vmul.f32 %v993, %v387
      %v996 = vsub.f32 %v984, %v994
      %v997 = vsub.f32 %v985, %v995
      %v998 = vmul.f32 %v996, %v996
      %v999 = vmul.f32 %v997, %v997
      %v1000 = vsel %vm380, %v998, 0.0
      %1001 = vadd.xlane.f32.xlu0 %v1000
      %v1002 = vpop.xlane.xlu0 %1001
      %v1003 = vsel %vm380, %v999, 0.0
      %1004 = vadd.xlane.f32.xlu0 %v1003
      %v1005 = vpop.xlane.xlu0 %1004
      %v1006 = vmul.f32 %v1002, %v387
      %v1007 = vmul.f32 %v1005, %v387
      %v1008 = vadd.f32 %v1006, 1e-05
      %v1009 = vadd.f32 %v1007, 1e-05
      %v1010 = vrsqrt.pop %v1008
      %v1011 = vrsqrt.pop %v1009
      %v1012 = vmul.f32 %v996, %v1010
      %v1013 = vmul.f32 %v997, %v1011
      %v1014 = vlaneseq
      %v1015 = vshrl.u32 %v1014, 7
      %v1016 = vsub.s32 0, %v1015
      %v1017 = vrot.slane %v986, %v1016
      %v1018 = vmul.f32 %v1012, %v1017
      %v1019 = vmul.f32 %v1013, %v1017
      %v1020 = vlaneseq
      %v1021 = vshrl.u32 %v1020, 7
      %v1022 = vsub.s32 0, %v1021
      %v1023 = vrot.slane %v987, %v1022
      %v1024 = vadd.f32 %v1018, %v1023
      %v1025 = vadd.f32 %v1019, %v1023
      %v1026 = vld [vmem:[%s2 + $0x18] sm:$0xff]
      %v1027 = vld [vmem:[%s2 + $0x20] sm:$0xff]
      %v1028 = vld [vmem:[%s2 + $0x28] sm:$0xff]
      %v1029 = vld [vmem:[%s2 + $0x30] sm:$0xff]
      %v1030 = vld [vmem:[%s2 + $0x38] sm:$0x1]
      %v1031 = vlaneseq
      %v1032 = vshrl.u32 %v1031, 7
      %v1033 = vsub.s32 0, %v1032
      %v1034 = vrot.slane %v1030, %v1033
      %v1036 = vsel %vm380, %v1024, 0
      %v1039 = vsel %vm380, %v1025, 0
      %1041 = vmatprep.subr.mxu0 0.0
      %1042 = vmatpush1.msra.mxu0 %v1026
      %1043 = vmatprep.subr.mxu0 0.0
      %1044 = vmatpush1.msra.mxu0 %v1027
      %1045 = vmatprep.subr.mxu0 0.0
      %1046 = vmatpush1.msra.mxu0 %v1028
      %1047 = vmatprep.subr.mxu0 0.0
      %1048 = vmatpush1.msra.mxu0 %v1029
      %1049 = vmatprep.subr.mxu0 0.0
      %1050 = vmatpush1.msra.mxu0 0.0
      %1051 = vmatprep.subr.mxu0 0.0
      %1052 = vmatpush1.msra.mxu0 0.0
      %1053 = vmatprep.subr.mxu0 0.0
      %1054 = vmatpush1.msra.mxu0 0.0
      %1055 = vmatprep.subr.mxu0 0.0
      %1056 = vmatpush1.msra.mxu0 0.0
      %1057 = vmatprep.subr.mxu0 0.0
      %1058 = vmatpush1.msra.mxu0 0.0
      %1059 = vmatprep.subr.mxu0 0.0
      %1060 = vmatpush1.msra.mxu0 0.0
      %1061 = vmatprep.subr.mxu0 0.0
      %1062 = vmatpush1.msra.mxu0 0.0
      %1063 = vmatprep.subr.mxu0 0.0
      %1064 = vmatpush1.msra.mxu0 0.0
      %1065 = vmatprep.subr.mxu0 0.0
      %1066 = vmatpush1.msra.mxu0 0.0
      %1067 = vmatprep.subr.mxu0 0.0
      %1068 = vmatpush1.msra.mxu0 0.0
      %1069 = vmatprep.subr.mxu0 0.0
      %1070 = vmatpush1.msra.mxu0 0.0
      %1071 = vmatprep.subr.mxu0 0.0
      %1072 = vmatpush1.msra.mxu0 0.0
      %1073 = vmatprep.subr.mxu0 0.0
      %1074 = vmatpush1.msra.mxu0 0.0
      %1075 = vmatprep.subr.mxu0 0.0
      %1076 = vmatpush1.msra.mxu0 0.0
      %1077 = vmatprep.subr.mxu0 0.0
      %1078 = vmatpush1.msra.mxu0 0.0
      %1079 = vmatprep.subr.mxu0 0.0
      %1080 = vmatpush1.msra.mxu0 0.0
      %1081 = vmatprep.subr.mxu0 0.0
      %1082 = vmatpush1.msra.mxu0 0.0
      %1083 = vmatprep.subr.mxu0 0.0
      %1084 = vmatpush1.msra.mxu0 0.0
      %1085 = vmatprep.subr.mxu0 0.0
      %1086 = vmatpush1.msra.mxu0 0.0
      %1087 = vmatprep.subr.mxu0 0.0
      %1088 = vmatpush1.msra.mxu0 0.0
      %1089 = vmatprep.subr.mxu0 0.0
      %1090 = vmatpush1.msra.mxu0 0.0
      %1091 = vmatprep.subr.mxu0 0.0
      %1092 = vmatpush1.msra.mxu0 0.0
      %1093 = vmatprep.subr.mxu0 0.0
      %1094 = vmatpush1.msra.mxu0 0.0
      %1095 = vmatprep.subr.mxu0 0.0
      %1096 = vmatpush1.msra.mxu0 0.0
      %1097 = vmatprep.subr.mxu0 0.0
      %1098 = vmatpush1.msra.mxu0 0.0
      %1099 = vmatprep.subr.mxu0 0.0
      %1100 = vmatpush1.msra.mxu0 0.0
      %1101 = vmatprep.subr.mxu0 0.0
      %1102 = vmatpush1.msra.mxu0 0.0
      %1103 = vmatprep.subr.mxu0 0.0
      %1104 = vmatpush1.msra.mxu0 0.0
      %1105 = vmatprep.mubr.f32.mxu0 0.0
      %1106 = vmatmul.mubr.f32.gmra.mrb[0].mxu0 %v1036
      %v1107 = vpop.f32.mrb[0].mxu0
      %v1108 = vadd.f32 %v1034, %v1107
      %v1109 = vpop.f32.mrb[0].mxu0
      %1110 = vmatprep.mubr.f32.mxu0 0.0
      %1111 = vmatmul.mubr.f32.gmra.mrb[0].mxu0 %v1039
      %v1112 = vpop.f32.mrb[0].mxu0
      %v1113 = vadd.f32 %v1034, %v1112
      %v1114 = vpop.f32.mrb[0].mxu0
      %1115 = vdwg.mxu0
      %1116 = vst.msk [vmem:[%s199] sm:$0xff] %vm380, %v1108
      %1117 = vst.msk [vmem:[%s199 + $0x8] sm:$0xff] %vm380, %v1113
      %s1118 = smul.u32 2, %s15
      %p1119 = scmp.lt.s32.totalorder %s1118, 3
      %s1120 = scalar_select %p1119, %s1118, 3
      %s1121 = smul.addr %s1120, 8
      %s1122 = scalar_lea.vmem %s4, %s1121
      // Predicated region
      $region37: #{fourier_transformer_forward.1} parent=35 // pred_check
        %p1123 = pneg %p122
      $region38: #{fourier_transformer_forward.1} parent=35 // pred_check_branch
        %1125 = sbr.rel (%p1123) target = $region40
      $region39: #{fourier_transformer_forward.1} parent=35 // pred_region
        %s1126 = smul.u32 2, %s15
      $region40: #{fourier_transformer_forward.1} parent=35 // pred_fallthru
        _
    $region36: #{fourier_transformer_forward.1} parent=5 // pred_fallthru
      _
    %p1127 = scmp.le.s32.totalorder 2, %s10
    // Predicated region
    $region41: #{fourier_transformer_forward.1} parent=5 // pred_check
      %p1128 = pneg %p1127
    $region42: #{fourier_transformer_forward.1} parent=5 // pred_check_branch
      %1130 = sbr.rel (%p1128) target = $region44
    $region43: #{fourier_transformer_forward.1} parent=5 // pred_region
      %s1131 = ssub.s32 %s10, 2
      // Predicated region
      $region45: #{fourier_transformer_forward.1} parent=43 // pred_check
        %p1132 = pneg %p128
      $region46: #{fourier_transformer_forward.1} parent=43 // pred_check_branch
        %1134 = sbr.rel (%p1132) target = $region48
      $region47: #{fourier_transformer_forward.1} parent=43 // pred_region
        %s1135 = smul.u32 2, %s16
        %p1136 = scmp.lt.s32.totalorder %s1135, 3
        %s1137 = scalar_select %p1136, %s1135, 3
        %s1138 = smul.addr %s1137, 8
        %s1139 = scalar_lea.vmem %s4, %s1138
      $region48: #{fourier_transformer_forward.1} parent=43 // pred_fallthru
        _
    $region44: #{fourier_transformer_forward.1} parent=5 // pred_fallthru
      _
  $region6: #{fourier_transformer_forward.1} parent=0 // loop_footer
    %s14 = sadd.s32 1, %s10
  $region7: #{fourier_transformer_forward.1} parent=0 // loop_footer_branch
    %9 = sbr.rel target = $region3
  $region8: #{fourier_transformer_forward.1} parent=0 // loop_exit
    _

</llo_original>
